<compile_context>
chip_gen: v5e
topology: v5e:2x2
jax: 0.10.0
libtpu: 0.0.40
codegen_flags: <defaults>
</compile_context>

<pallas_src>
import jax
import jax.numpy as jnp
from jax.experimental import pallas as pl
from jax.experimental.pallas import tpu as pltpu

_NEG_BIG = -1e30  # padding value for logits (finite, exp() underflows to 0)


def _round_up(x: int, m: int) -> int:
    return ((x + m - 1) // m) * m


# ---------------------------------------------------------------------------
# Kernels
# ---------------------------------------------------------------------------
def _online_update(x, wt, m_sc, l_sc, swt_sc, swtx_sc):
    """Streaming logsumexp + running sums over one (block_b, block_c) chunk."""
    m_prev = m_sc[...]
    m_new = jnp.maximum(m_prev, jnp.max(x, axis=-1, keepdims=True))
    l_sc[...] = jnp.exp(m_prev - m_new) * l_sc[...] + jnp.sum(
        jnp.exp(x - m_new), axis=-1, keepdims=True)
    m_sc[...] = m_new
    swt_sc[...] = swt_sc[...] + jnp.sum(wt, axis=-1, keepdims=True)
    swtx_sc[...] = swtx_sc[...] + jnp.sum(wt * x, axis=-1, keepdims=True)


def _init_scratch(m_sc, l_sc, swt_sc, swtx_sc):
    m_sc[...] = jnp.full(m_sc.shape, -jnp.inf, dtype=jnp.float32)
    l_sc[...] = jnp.zeros(l_sc.shape, dtype=jnp.float32)
    swt_sc[...] = jnp.zeros(swt_sc.shape, dtype=jnp.float32)
    swtx_sc[...] = jnp.zeros(swtx_sc.shape, dtype=jnp.float32)


def _finalize(out_ref, m_sc, l_sc, swt_sc, swtx_sc):
    # loss_b = -(sum_c wt*x - (m + log(l)) * sum_c wt)
    lse = m_sc[...] + jnp.log(l_sc[...])
    out_ref[...] = -(swtx_sc[...] - lse * swt_sc[...])


def _mult_loss_kernel_weighted(logits_ref, target_ref, weights_ref, out_ref,
                               m_sc, l_sc, swt_sc, swtx_sc):
    j = pl.program_id(1)

    @pl.when(j == 0)
    def _():
        _init_scratch(m_sc, l_sc, swt_sc, swtx_sc)

    x = logits_ref[...].astype(jnp.float32)
    wt = weights_ref[...].astype(jnp.float32) * target_ref[...].astype(jnp.float32)
    _online_update(x, wt, m_sc, l_sc, swt_sc, swtx_sc)

    @pl.when(j == pl.num_programs(1) - 1)
    def _():
        _finalize(out_ref, m_sc, l_sc, swt_sc, swtx_sc)


def _mult_loss_kernel_unweighted(logits_ref, target_ref, out_ref,
                                 m_sc, l_sc, swt_sc, swtx_sc):
    j = pl.program_id(1)

    @pl.when(j == 0)
    def _():
        _init_scratch(m_sc, l_sc, swt_sc, swtx_sc)

    x = logits_ref[...].astype(jnp.float32)
    wt = target_ref[...].astype(jnp.float32)
    _online_update(x, wt, m_sc, l_sc, swt_sc, swtx_sc)

    @pl.when(j == pl.num_programs(1) - 1)
    def _():
        _finalize(out_ref, m_sc, l_sc, swt_sc, swtx_sc)


# ---------------------------------------------------------------------------
# Wrapper
# ---------------------------------------------------------------------------
def multinomial_loss(logits, target, weights=None, size_average: bool = False,
                     *, block_b: int | None = None, block_c: int | None = None):
    B, C = logits.shape
    assert target.shape == (B, C)
    weighted = weights is not None
    if weighted:
        assert weights.shape == (B, C)

    # Tile selection: biggest tiles that comfortably fit double-buffered VMEM
    # on all generations (<= 3 inputs * 2 bufs * 512 * 2048 * 4 B = 24 MiB,
    # well under v7x's 64 MiB physical VMEM).
    bc = block_c if block_c is not None else min(_round_up(C, 128), 2048)
    bc = _round_up(min(bc, _round_up(C, 128)), 128)
    bb = block_b if block_b is not None else min(_round_up(B, 8), 512)
    bb = _round_up(min(bb, _round_up(B, 8)), 8)

    # Pad to tile multiples (padded logits use a huge negative so exp() -> 0,
    # padded targets/weights are 0, so padded rows/cols contribute nothing).
    Bp, Cp = _round_up(B, bb), _round_up(C, bc)
    if (Bp, Cp) != (B, C):
        pad = ((0, Bp - B), (0, Cp - C))
        logits = jnp.pad(logits, pad, constant_values=_NEG_BIG)
        target = jnp.pad(target, pad)
        if weighted:
            weights = jnp.pad(weights, pad)

    grid = (Bp // bb, Cp // bc)
    in_spec = pl.BlockSpec((bb, bc), lambda i, j: (i, j))
    out_spec = pl.BlockSpec((bb, 1), lambda i, j: (i, 0))

    n_in = 3 if weighted else 2
    itemsize = max(jnp.dtype(logits.dtype).itemsize,
                   jnp.dtype(target.dtype).itemsize,
                   jnp.dtype(weights.dtype).itemsize if weighted else 1)

    # Double-buffered input tiles + small headroom; stay under v7x physical.
    vmem_need = n_in * 2 * bb * bc * itemsize + (2 << 20)
    vmem_limit = int(min(max(vmem_need, 16 << 20), 48 << 20))

    cost = pl.CostEstimate(
        flops=8 * Bp * Cp,
        transcendentals=Bp * Cp,
        bytes_accessed=n_in * Bp * Cp * itemsize + Bp * 4,
    )

    kernel = _mult_loss_kernel_weighted if weighted else _mult_loss_kernel_unweighted
    inputs = (logits, target, weights) if weighted else (logits, target)

    loss_col = pl.pallas_call(
        kernel,
        out_shape=jax.ShapeDtypeStruct((Bp, 1), jnp.float32),
        grid_spec=pltpu.PrefetchScalarGridSpec(
            num_scalar_prefetch=0,
            grid=grid,
            in_specs=[in_spec] * n_in,
            out_specs=out_spec,
            scratch_shapes=[pltpu.VMEM((bb, 1), jnp.float32)] * 4,
        ),
        compiler_params=pltpu.CompilerParams(
            dimension_semantics=("parallel", "arbitrary"),
            vmem_limit_bytes=vmem_limit,
        ),
        cost_estimate=cost,
    )(*inputs)

    loss = loss_col[:B, 0]                     # (B,)
    return jnp.mean(loss) if size_average else loss


# ---------------------------------------------------------------------------
# Reference + self-test
# ---------------------------------------------------------------------------
def _reference(logits, target, weights=None, size_average=False):
    if weights is None:
        weights = jnp.ones_like(logits)
    log_probs = jax.nn.log_softmax(logits, axis=-1) * weights
    loss = -jnp.einsum("bc,bc->b", log_probs, target)
    return jnp.mean(loss) if size_average else loss


if __name__ == "__main__":
    key = jax.random.PRNGKey(0)
    k1, k2, k3, k4, k5, k6 = jax.random.split(key, 6)

    # ---- Test 1: aligned shapes, weighted / unweighted / size_average ------
    B, C = 8, 256
    logits = jax.random.normal(k1, (B, C), dtype=jnp.float32)
    target = (jax.random.uniform(k2, (B, C)) < 0.1).astype(jnp.float32)
    weights = jax.random.uniform(k3, (B, C), dtype=jnp.float32)

    out = jax.block_until_ready(multinomial_loss(logits, target, weights))
    ref = _reference(logits, target, weights)
    assert out.shape == (B,)
    assert jnp.allclose(out, ref, rtol=1e-5, atol=1e-5)

    out_mean = jax.block_until_ready(
        multinomial_loss(logits, target, None, size_average=True))
    ref_mean = _reference(logits, target, None, size_average=True)
    assert jnp.allclose(out_mean, ref_mean, rtol=1e-5, atol=1e-5)

    # ---- Test 2: unaligned shapes + forced C tiling (streaming lse path) ---
    B2, C2 = 10, 380
    logits2 = jax.random.normal(k4, (B2, C2), dtype=jnp.float32)
    target2 = (jax.random.uniform(k5, (B2, C2)) < 0.1).astype(jnp.float32)
    weights2 = jax.random.uniform(k6, (B2, C2), dtype=jnp.float32)

    out2 = jax.block_until_ready(
        multinomial_loss(logits2, target2, weights2, block_b=8, block_c=128))
    ref2 = _reference(logits2, target2, weights2)
    assert out2.shape == (B2,)
    assert jnp.allclose(out2, ref2, rtol=2e-5, atol=1e-4)

    print("KERNEL_OK")
</pallas_src>

<mosaic_0001>
module attributes {stable_mosaic.version = 11 : i64} {
  func.func @_mult_loss_kernel_weighted(%arg0: i32, %arg1: i32, %arg2: memref<8x256xf32, #tpu.memory_space<vmem>>, %arg3: memref<8x256xf32, #tpu.memory_space<vmem>>, %arg4: memref<8x256xf32, #tpu.memory_space<vmem>>, %arg5: memref<8x1xf32, #tpu.memory_space<vmem>>, %arg6: memref<8x1xf32, #tpu.memory_space<vmem>>, %arg7: memref<8x1xf32, #tpu.memory_space<vmem>>, %arg8: memref<8x1xf32, #tpu.memory_space<vmem>>, %arg9: memref<8x1xf32, #tpu.memory_space<vmem>>) attributes {dimension_semantics = [#tpu.dimension_semantics<parallel>, #tpu.dimension_semantics<arbitrary>], iteration_bounds = array<i64: 1, 1>, scalar_prefetch = 0 : i64, scratch_operands = 4 : i64, tpu.core_type = #tpu.core_type<tc>, window_params = [{transform_indices = @transform_0, window_bounds = array<i64: 8, 256>}, {transform_indices = @transform_1, window_bounds = array<i64: 8, 256>}, {transform_indices = @transform_2, window_bounds = array<i64: 8, 256>}, {transform_indices = @transform_3, window_bounds = array<i64: 8, 1>}]} {
    %c0_i32 = arith.constant 0 : i32
    %0 = arith.cmpi eq, %arg1, %c0_i32 : i32
    %1 = arith.extui %0 : i1 to i32
    %c0_i32_0 = arith.constant 0 : i32
    %2 = arith.cmpi ne, %1, %c0_i32_0 : i32
    scf.if %2 {
      %cst_27 = arith.constant 0xFF800000 : f32
      %37 = vector.broadcast %cst_27 : f32 to vector<8x1xf32>
      %c0_28 = arith.constant 0 : index
      %c0_29 = arith.constant 0 : index
      %38 = vector.load %arg6[%c0_28, %c0_29] : memref<8x1xf32, #tpu.memory_space<vmem>>, vector<8x1xf32>
      tpu.vector_store %arg6[%c0_28, %c0_29], %37 {strides = array<i32>} : memref<8x1xf32, #tpu.memory_space<vmem>>, vector<8x1xf32>,
      %cst_30 = arith.constant 0.000000e+00 : f32
      %39 = vector.broadcast %cst_30 : f32 to vector<8x1xf32>
      %c0_31 = arith.constant 0 : index
      %c0_32 = arith.constant 0 : index
      %40 = vector.load %arg7[%c0_31, %c0_32] : memref<8x1xf32, #tpu.memory_space<vmem>>, vector<8x1xf32>
      tpu.vector_store %arg7[%c0_31, %c0_32], %39 {strides = array<i32>} : memref<8x1xf32, #tpu.memory_space<vmem>>, vector<8x1xf32>,
      %cst_33 = arith.constant 0.000000e+00 : f32
      %41 = vector.broadcast %cst_33 : f32 to vector<8x1xf32>
      %c0_34 = arith.constant 0 : index
      %c0_35 = arith.constant 0 : index
      %42 = vector.load %arg8[%c0_34, %c0_35] : memref<8x1xf32, #tpu.memory_space<vmem>>, vector<8x1xf32>
      tpu.vector_store %arg8[%c0_34, %c0_35], %41 {strides = array<i32>} : memref<8x1xf32, #tpu.memory_space<vmem>>, vector<8x1xf32>,
      %cst_36 = arith.constant 0.000000e+00 : f32
      %43 = vector.broadcast %cst_36 : f32 to vector<8x1xf32>
      %c0_37 = arith.constant 0 : index
      %c0_38 = arith.constant 0 : index
      %44 = vector.load %arg9[%c0_37, %c0_38] : memref<8x1xf32, #tpu.memory_space<vmem>>, vector<8x1xf32>
      tpu.vector_store %arg9[%c0_37, %c0_38], %43 {strides = array<i32>} : memref<8x1xf32, #tpu.memory_space<vmem>>, vector<8x1xf32>,
    } else {
    }
    %c0 = arith.constant 0 : index
    %c0_1 = arith.constant 0 : index
    %3 = vector.load %arg2[%c0, %c0_1] : memref<8x256xf32, #tpu.memory_space<vmem>>, vector<8x256xf32>
    %c0_2 = arith.constant 0 : index
    %c0_3 = arith.constant 0 : index
    %4 = vector.load %arg4[%c0_2, %c0_3] : memref<8x256xf32, #tpu.memory_space<vmem>>, vector<8x256xf32>
    %c0_4 = arith.constant 0 : index
    %c0_5 = arith.constant 0 : index
    %5 = vector.load %arg3[%c0_4, %c0_5] : memref<8x256xf32, #tpu.memory_space<vmem>>, vector<8x256xf32>
    %6 = arith.mulf %4, %5 : vector<8x256xf32>
    %c0_6 = arith.constant 0 : index
    %c0_7 = arith.constant 0 : index
    %7 = vector.load %arg6[%c0_6, %c0_7] : memref<8x1xf32, #tpu.memory_space<vmem>>, vector<8x1xf32>
    %cst = arith.constant dense<0xFF800000> : vector<8xf32>
    %8 = vector.multi_reduction <maximumf>, %3, %cst [1] : vector<8x256xf32> to vector<8xf32>
    %9 = vector.shape_cast %8 : vector<8xf32> to vector<8x1xf32>
    %10 = arith.maximumf %7, %9 : vector<8x1xf32>
    %11 = arith.subf %7, %10 : vector<8x1xf32>
    %12 = math.exp %11 : vector<8x1xf32>
    %c0_8 = arith.constant 0 : index
    %c0_9 = arith.constant 0 : index
    %13 = vector.load %arg7[%c0_8, %c0_9] : memref<8x1xf32, #tpu.memory_space<vmem>>, vector<8x1xf32>
    %14 = arith.mulf %12, %13 : vector<8x1xf32>
    %15 = vector.broadcast %10 : vector<8x1xf32> to vector<8x256xf32>
    %16 = arith.subf %3, %15 : vector<8x256xf32>
    %17 = math.exp %16 : vector<8x256xf32>
    %cst_10 = arith.constant dense<0.000000e+00> : vector<8xf32>
    %18 = vector.multi_reduction <add>, %17, %cst_10 [1] : vector<8x256xf32> to vector<8xf32>
    %19 = vector.shape_cast %18 : vector<8xf32> to vector<8x1xf32>
    %20 = arith.addf %14, %19 : vector<8x1xf32>
    %c0_11 = arith.constant 0 : index
    %c0_12 = arith.constant 0 : index
    %21 = vector.load %arg7[%c0_11, %c0_12] : memref<8x1xf32, #tpu.memory_space<vmem>>, vector<8x1xf32>
    tpu.vector_store %arg7[%c0_11, %c0_12], %20 {strides = array<i32>} : memref<8x1xf32, #tpu.memory_space<vmem>>, vector<8x1xf32>,
    %c0_13 = arith.constant 0 : index
    %c0_14 = arith.constant 0 : index
    %22 = vector.load %arg6[%c0_13, %c0_14] : memref<8x1xf32, #tpu.memory_space<vmem>>, vector<8x1xf32>
    tpu.vector_store %arg6[%c0_13, %c0_14], %10 {strides = array<i32>} : memref<8x1xf32, #tpu.memory_space<vmem>>, vector<8x1xf32>,
    %c0_15 = arith.constant 0 : index
    %c0_16 = arith.constant 0 : index
    %23 = vector.load %arg8[%c0_15, %c0_16] : memref<8x1xf32, #tpu.memory_space<vmem>>, vector<8x1xf32>
    %cst_17 = arith.constant dense<0.000000e+00> : vector<8xf32>
    %24 = vector.multi_reduction <add>, %6, %cst_17 [1] : vector<8x256xf32> to vector<8xf32>
    %25 = vector.shape_cast %24 : vector<8xf32> to vector<8x1xf32>
    %26 = arith.addf %23, %25 : vector<8x1xf32>
    %c0_18 = arith.constant 0 : index
    %c0_19 = arith.constant 0 : index
    %27 = vector.load %arg8[%c0_18, %c0_19] : memref<8x1xf32, #tpu.memory_space<vmem>>, vector<8x1xf32>
    tpu.vector_store %arg8[%c0_18, %c0_19], %26 {strides = array<i32>} : memref<8x1xf32, #tpu.memory_space<vmem>>, vector<8x1xf32>,
    %c0_20 = arith.constant 0 : index
    %c0_21 = arith.constant 0 : index
    %28 = vector.load %arg9[%c0_20, %c0_21] : memref<8x1xf32, #tpu.memory_space<vmem>>, vector<8x1xf32>
    %29 = arith.mulf %6, %3 : vector<8x256xf32>
    %cst_22 = arith.constant dense<0.000000e+00> : vector<8xf32>
    %30 = vector.multi_reduction <add>, %29, %cst_22 [1] : vector<8x256xf32> to vector<8xf32>
    %31 = vector.shape_cast %30 : vector<8xf32> to vector<8x1xf32>
    %32 = arith.addf %28, %31 : vector<8x1xf32>
    %c0_23 = arith.constant 0 : index
    %c0_24 = arith.constant 0 : index
    %33 = vector.load %arg9[%c0_23, %c0_24] : memref<8x1xf32, #tpu.memory_space<vmem>>, vector<8x1xf32>
    tpu.vector_store %arg9[%c0_23, %c0_24], %32 {strides = array<i32>} : memref<8x1xf32, #tpu.memory_space<vmem>>, vector<8x1xf32>,
    %c0_i32_25 = arith.constant 0 : i32
    %34 = arith.cmpi eq, %arg1, %c0_i32_25 : i32
    %35 = arith.extui %34 : i1 to i32
    %c0_i32_26 = arith.constant 0 : i32
    %36 = arith.cmpi ne, %35, %c0_i32_26 : i32
    scf.if %36 {
      %c0_27 = arith.constant 0 : index
      %c0_28 = arith.constant 0 : index
      %37 = vector.load %arg6[%c0_27, %c0_28] : memref<8x1xf32, #tpu.memory_space<vmem>>, vector<8x1xf32>
      %c0_29 = arith.constant 0 : index
      %c0_30 = arith.constant 0 : index
      %38 = vector.load %arg7[%c0_29, %c0_30] : memref<8x1xf32, #tpu.memory_space<vmem>>, vector<8x1xf32>
      %39 = math.log %38 : vector<8x1xf32>
      %40 = arith.addf %37, %39 : vector<8x1xf32>
      %c0_31 = arith.constant 0 : index
      %c0_32 = arith.constant 0 : index
      %41 = vector.load %arg9[%c0_31, %c0_32] : memref<8x1xf32, #tpu.memory_space<vmem>>, vector<8x1xf32>
      %c0_33 = arith.constant 0 : index
      %c0_34 = arith.constant 0 : index
      %42 = vector.load %arg8[%c0_33, %c0_34] : memref<8x1xf32, #tpu.memory_space<vmem>>, vector<8x1xf32>
      %43 = arith.mulf %40, %42 : vector<8x1xf32>
      %44 = arith.subf %41, %43 : vector<8x1xf32>
      %cst_35 = arith.constant 0.000000e+00 : f32
      %45 = vector.broadcast %cst_35 : f32 to vector<8x1xf32>
      %46 = arith.subf %45, %44 : vector<8x1xf32>
      %c0_36 = arith.constant 0 : index
      %c0_37 = arith.constant 0 : index
      %47 = vector.load %arg5[%c0_36, %c0_37] : memref<8x1xf32, #tpu.memory_space<vmem>>, vector<8x1xf32>
      tpu.vector_store %arg5[%c0_36, %c0_37], %46 {strides = array<i32>} : memref<8x1xf32, #tpu.memory_space<vmem>>, vector<8x1xf32>,
    } else {
    }
    return
  }
  func.func @transform_0(%arg0: i32, %arg1: i32) -> (i32, i32) {
    %c0_i32 = arith.constant 0 : i32
    return %arg0, %arg1 : i32, i32
  }
  func.func @transform_1(%arg0: i32, %arg1: i32) -> (i32, i32) {
    %c0_i32 = arith.constant 0 : i32
    return %arg0, %arg1 : i32, i32
  }
  func.func @transform_2(%arg0: i32, %arg1: i32) -> (i32, i32) {
    %c0_i32 = arith.constant 0 : i32
    return %arg0, %arg1 : i32, i32
  }
  func.func @transform_3(%arg0: i32, %arg1: i32) -> (i32, i32) {
    %c0_i32 = arith.constant 0 : i32
    %c0_i32_0 = arith.constant 0 : i32
    return %arg0, %c0_i32 : i32, i32
  }
}

</mosaic_0001>

<llo_original>
// kernel: tpu_custom_call.1
$region0: #{tpu_custom_call.1}
  #allocation0 [shape = 'u32[]', space=smem, size = 0x4, offset = 0x4, fixed_abs, tag = 'smem constant byte address 0x4 - core index']
  #allocation1 [shape = 'u32[72,128]{1,0:T(1,128)}', space=vmem, size = 0x9000, scoped, tag = 'internal scratch']
  #allocation2 [shape = 'f32[8,1]{1,0:T(8,128)}', space=vmem, size = 0x1000, scoped, tag = 'scratch operand']
  #allocation3 [shape = 'f32[8,1]{1,0:T(8,128)}', space=vmem, size = 0x1000, scoped, tag = 'scratch operand']
  #allocation4 [shape = 'f32[8,1]{1,0:T(8,128)}', space=vmem, size = 0x1000, scoped, tag = 'scratch operand']
  #allocation5 [shape = 'f32[8,1]{1,0:T(8,128)}', space=vmem, size = 0x1000, scoped, tag = 'scratch operand']
  %s0 = inlined_call_operand.hbm [shape: f32[8,256], index: 0, kind: input, shape index: {}]
  %s1 = inlined_call_operand.hbm [shape: f32[8,256], index: 1, kind: input, shape index: {}]
  %s2 = inlined_call_operand.hbm [shape: f32[8,256], index: 2, kind: input, shape index: {}]
  %s3 = inlined_call_operand.vmem [shape: f32[8,1], index: 3, kind: output, shape index: {}]
  %s4 = sld [smem:[#allocation0]]
  $region42: #{tpu_custom_call.1} parent=0
    _
  %s6 = ssub.s32 1, %s4
  %s7 = scalar_select 0, %s6, %s4
  $region1: #{tpu_custom_call.1} parent=0
    #allocation6 [shape = 'u8[8192]{0}', space=vmem, size = 0x2000, scoped, tag = 'input window, operand 0, single buffered']
    #allocation7 [shape = 's32[1]{0}', space=sflag, size = 0x4, scoped, tag = 'scoped memory for tpu_custom_call.1']
    #allocation8 [shape = 'u8[8192]{0}', space=vmem, size = 0x2000, scoped, tag = 'input window, operand 1, single buffered']
    #allocation9 [shape = 's32[1]{0}', space=sflag, size = 0x4, scoped, tag = 'scoped memory for tpu_custom_call.1']
    #allocation10 [shape = 'u8[8192]{0}', space=vmem, size = 0x2000, scoped, tag = 'input window, operand 2, single buffered']
    %8 = vsyncpa [#allocation7], 0
    %9 = vsyncpa [#allocation9], 0
    // Predicated region
    $region2: #{tpu_custom_call.1} parent=1 // pred_check
      _
    $region3: #{tpu_custom_call.1} parent=1 // pred_check_branch
      %11 = sbr.rel (0) target = $region5
    $region4: #{tpu_custom_call.1} parent=1 // pred_region
      %13 = vsyncadd [#allocation7], 0
      %s15 = sshll.u32 %s0, 4
      %s16 = int_to_ptr.hbm [resolvable:$true] %s15
      %s17 = sshll.u32 [#allocation6], 4
      %s18 = int_to_ptr.vmem [resolvable:$true] %s17
      %20 = dma.hbm_to_vmem [thread:$0]  %s16, 256, %s18, [#allocation7]
    $region5: #{tpu_custom_call.1} parent=1 // pred_fallthru
      _
    // Predicated region
    $region6: #{tpu_custom_call.1} parent=1 // pred_check
      _
    $region7: #{tpu_custom_call.1} parent=1 // pred_check_branch
      %22 = sbr.rel (0) target = $region9
    $region8: #{tpu_custom_call.1} parent=1 // pred_region
      %24 = vsyncadd [#allocation9], 0
      %s26 = sshll.u32 %s1, 4
      %s27 = int_to_ptr.hbm [resolvable:$true] %s26
      %s28 = sshll.u32 [#allocation8], 4
      %s29 = int_to_ptr.vmem [resolvable:$true] %s28
      %31 = dma.hbm_to_vmem [thread:$0]  %s27, 256, %s29, [#allocation9]
    $region9: #{tpu_custom_call.1} parent=1 // pred_fallthru
      _
    // Predicated region
    $region10: #{tpu_custom_call.1} parent=1 // pred_check
      _
    $region11: #{tpu_custom_call.1} parent=1 // pred_check_branch
      %33 = sbr.rel (0) target = $region13
    $region12: #{tpu_custom_call.1} parent=1 // pred_region
      %35 = vsyncadd [#allocation9], 0
      %s37 = sshll.u32 %s2, 4
      %s38 = int_to_ptr.hbm [resolvable:$true] %s37
      %s39 = sshll.u32 [#allocation10], 4
      %s40 = int_to_ptr.vmem [resolvable:$true] %s39
      %42 = dma.hbm_to_vmem [thread:$0]  %s38, 256, %s40, [#allocation9]
    $region13: #{tpu_custom_call.1} parent=1 // pred_fallthru
      _
    // Predicated region
    $region14: #{tpu_custom_call.1} parent=1 // pred_check
      _
    $region15: #{tpu_custom_call.1} parent=1 // pred_check_branch
      %44 = sbr.rel (0) target = $region17
    $region16: #{tpu_custom_call.1} parent=1 // pred_region
      %46 = dma.done [#allocation7], 256
    $region17: #{tpu_custom_call.1} parent=1 // pred_fallthru
      _
    // Predicated region
    $region18: #{tpu_custom_call.1} parent=1 // pred_check
      _
    $region19: #{tpu_custom_call.1} parent=1 // pred_check_branch
      %48 = sbr.rel (0) target = $region21
    $region20: #{tpu_custom_call.1} parent=1 // pred_region
      %50 = dma.done [#allocation9], 256
    $region21: #{tpu_custom_call.1} parent=1 // pred_fallthru
      _
    // Predicated region
    $region22: #{tpu_custom_call.1} parent=1 // pred_check
      _
    $region23: #{tpu_custom_call.1} parent=1 // pred_check_branch
      %52 = sbr.rel (0) target = $region25
    $region24: #{tpu_custom_call.1} parent=1 // pred_region
      %54 = dma.done [#allocation9], 256
    $region25: #{tpu_custom_call.1} parent=1 // pred_fallthru
      _
    %p55 = scmp.eq.s32.totalorder 0, 0
    // Predicated region
    $region26: #{tpu_custom_call.1} parent=1 // pred_check
      %p56 = pneg %p55
    $region27: #{tpu_custom_call.1} parent=1 // pred_check_branch
      %58 = sbr.rel (%p56) target = $region29
    $region28: #{tpu_custom_call.1} parent=1 // pred_region
      %vm59 = vcmask 7168
      %60 = vst.msk [vmem:[#allocation2] sm:$0xff] %vm59, -inf
      %61 = vst.msk [vmem:[#allocation3] sm:$0xff] %vm59, 0.0
      %62 = vst.msk [vmem:[#allocation4] sm:$0xff] %vm59, 0.0
      %63 = vst.msk [vmem:[#allocation5] sm:$0xff] %vm59, 0.0
    $region29: #{tpu_custom_call.1} parent=1 // pred_fallthru
      _
    %v64 = vld [vmem:[#allocation6] sm:$0xff]
    %v65 = vld [vmem:[#allocation6 + $0x8] sm:$0xff]
    %v66 = vld [vmem:[#allocation10] sm:$0xff]
    %v67 = vld [vmem:[#allocation10 + $0x8] sm:$0xff]
    %v68 = vld [vmem:[#allocation8] sm:$0xff]
    %v69 = vld [vmem:[#allocation8 + $0x8] sm:$0xff]
    %v70 = vmul.f32 %v66, %v68
    %v71 = vmul.f32 %v67, %v69
    %v72 = vld [vmem:[#allocation2] sm:$0xff]
    %v73 = vmax.f32 %v64, %v65
    %74 = vmax.xlane.f32.xlu0 %v73
    %v75 = vpop.xlane.xlu0 %74
    %v76 = vmax.f32 %v72, %v75
    %v77 = vsub.f32 %v72, %v76
    %v78 = vmul.f32 %v77, 1.442695
    %v79 = vpow.pop %v78
    %v80 = vld [vmem:[#allocation3] sm:$0xff]
    %v81 = vmul.f32 %v79, %v80
    %83 = vset.pattern.permute.xlu0 0
    %84 = vperm.xlu0 %83, %v76
    %v85 = vpop.permute.xlu0 %84
    %v87 = vsub.f32 %v64, %v85
    %v88 = vsub.f32 %v65, %v85
    %v89 = vmul.f32 %v87, 1.442695
    %v90 = vpow.pop %v89
    %v91 = vmul.f32 %v88, 1.442695
    %v92 = vpow.pop %v91
    %v93 = vadd.f32 %v90, %v92
    %94 = vadd.xlane.f32.xlu0 %v93
    %v95 = vpop.xlane.xlu0 %94
    %v96 = vadd.f32 %v81, %v95
    %vm97 = vcmask 7168
    %98 = vst.msk [vmem:[#allocation3] sm:$0xff] %vm97, %v96
    %99 = vst.msk [vmem:[#allocation2] sm:$0xff] %vm97, %v76
    %v100 = vld [vmem:[#allocation4] sm:$0xff]
    %v101 = vadd.f32 %v70, %v71
    %102 = vadd.xlane.f32.xlu0 %v101
    %v103 = vpop.xlane.xlu0 %102
    %v104 = vadd.f32 %v100, %v103
    %105 = vst.msk [vmem:[#allocation4] sm:$0xff] %vm97, %v104
    %v106 = vld [vmem:[#allocation5] sm:$0xff]
    %v107 = vmul.f32 %v70, %v64
    %v108 = vmul.f32 %v71, %v65
    %v109 = vadd.f32 %v107, %v108
    %110 = vadd.xlane.f32.xlu0 %v109
    %v111 = vpop.xlane.xlu0 %110
    %v112 = vadd.f32 %v106, %v111
    %113 = vst.msk [vmem:[#allocation5] sm:$0xff] %vm97, %v112
    // Predicated region
    $region30: #{tpu_custom_call.1} parent=1 // pred_check
      %p114 = pneg %p55
    $region31: #{tpu_custom_call.1} parent=1 // pred_check_branch
      %116 = sbr.rel (%p114) target = $region33
    $region32: #{tpu_custom_call.1} parent=1 // pred_region
      %v117 = vld [vmem:[#allocation2] sm:$0xff]
      %v118 = vld [vmem:[#allocation3] sm:$0xff]
      %v119 = vlog2.pop %v118
      %v120 = vmul.f32 %v119, 0.6931472
      %v121 = vadd.f32 %v117, %v120
      %v122 = vld [vmem:[#allocation5] sm:$0xff]
      %v123 = vld [vmem:[#allocation4] sm:$0xff]
      %v124 = vmul.f32 %v121, %v123
      %v125 = vsub.f32 %v122, %v124
      %v126 = vsub.f32 0.0, %v125
      %127 = vst.msk [vmem:[%s3] sm:$0xff] %vm97, %v126
    $region33: #{tpu_custom_call.1} parent=1 // pred_fallthru
      _
    // Predicated region
    $region34: #{tpu_custom_call.1} parent=1 // pred_check
      _
    $region35: #{tpu_custom_call.1} parent=1 // pred_check_branch
      %129 = sbr.rel (0) target = $region37
    $region36: #{tpu_custom_call.1} parent=1 // pred_region
      _
    $region37: #{tpu_custom_call.1} parent=1 // pred_fallthru
      _
    // Predicated region
    $region38: #{tpu_custom_call.1} parent=1 // pred_check
      _
    $region39: #{tpu_custom_call.1} parent=1 // pred_check_branch
      %131 = sbr.rel (0) target = $region41
    $region40: #{tpu_custom_call.1} parent=1 // pred_region
      _
    $region41: #{tpu_custom_call.1} parent=1 // pred_fallthru
      _
    %132 = vsyncpa [#allocation7], 1
    %133 = vsyncpa [#allocation9], 1

</llo_original>
